<compile_context>
chip_gen: v5e
topology: v5e:2x2
jax: 0.10.0
libtpu: 0.0.40
codegen_flags: <defaults>
</compile_context>

<pallas_src>
import functools

import jax
import jax.numpy as jnp
from jax import lax
from jax.experimental import pallas as pl
from jax.experimental.pallas import tpu as pltpu


def _attention_kernel(x_ref, wqkv_ref, bqkv_ref, wo_ref, bo_ref, o_ref,
                      acc_ref, *, num_heads, head_dim):
    # Grid: (batch, head). Per step: one batch element's full sequence and ONE
    # head's weights.
    #   x_ref:    (1, S, H)   revisited across the head axis (no re-DMA)
    #   wqkv_ref: (1, H, 3d)  this head's fused [Wq | Wk | Wv] columns
    #   bqkv_ref: (1, 1, 3d)
    #   wo_ref:   (1, d, H)   this head's rows of W_out
    #   bo_ref:   (1, H)
    #   o_ref:    (1, S, H)   written only on the last head step
    #   acc_ref:  (S, H) f32  output-projection accumulator across heads
    h = pl.program_id(1)
    d = head_dim

    @pl.when(h == 0)
    def _init():
        acc_ref[...] = jnp.zeros_like(acc_ref)

    x = x_ref[0]                                          # (S, H), native dtype

    # Per-head fused Q/K/V projection: (S, H) @ (H, 3d), f32 accumulation.
    qkv = (jnp.dot(x, wqkv_ref[0], preferred_element_type=jnp.float32)
           + bqkv_ref[0])                                 # (S, 3d) f32

    scale = 1.0 / float(d) ** 0.5
    q = (qkv[:, :d] * scale).astype(x.dtype)              # scale folded into q
    k = qkv[:, d:2 * d].astype(x.dtype)
    v = qkv[:, 2 * d:].astype(x.dtype)

    # scores = (q * scale) @ k^T, contraction on the head dim (no transpose).
    s = lax.dot_general(q, k, (((1,), (1,)), ((), ())),
                        preferred_element_type=jnp.float32)       # (S, S) f32

    # Numerically stable softmax with DEFERRED normalization. No causal mask
    # in this module; dropout on probs is identity in eval mode.
    m = jnp.max(s, axis=-1, keepdims=True)
    p = jnp.exp(s - m)                                    # (S, S) f32
    l = jnp.sum(p, axis=-1, keepdims=True)                # (S, 1) f32

    ctx = jnp.dot(p.astype(x.dtype), v,
                  preferred_element_type=jnp.float32)     # (S, d) f32
    ctx = ctx * pl.reciprocal(l, approx=True)             # normalize (EUP slot)

    # Accumulate this head's slice of the output projection:
    #   out = sum_h ctx_h @ W_out[h*d:(h+1)*d, :]   (+ b_out at the end)
    acc_ref[...] += jnp.dot(ctx.astype(x.dtype), wo_ref[0],
                            preferred_element_type=jnp.float32)

    @pl.when(h == num_heads - 1)
    def _finalize():
        o_ref[0] = (acc_ref[...] + bo_ref[...]).astype(o_ref.dtype)


@functools.partial(jax.jit, static_argnames=("num_heads",))
def gpt2_attention(x, wq, bq, wk, bk, wv, bv, wo, bo, *, num_heads):
    """x: [B, S, H]; w*: [H, H] ([in, out], transposed vs nn.Linear); b*: [H]."""
    B, S, H = x.shape
    assert H % num_heads == 0
    d = H // num_heads

    # Host-side re-layout into per-head contiguous blocks (lane-dense blocks
    # delivered by BlockSpec -> no in-kernel lane slicing of weights).
    def per_head_cols(w):                                 # (H, H) -> (nh, H, d)
        return w.reshape(H, num_heads, d).transpose(1, 0, 2)

    w_qkv_heads = jnp.concatenate(
        [per_head_cols(wq), per_head_cols(wk), per_head_cols(wv)],
        axis=2)                                           # (nh, H, 3d)
    b_qkv_heads = jnp.concatenate(
        [bq.reshape(num_heads, 1, d), bk.reshape(num_heads, 1, d),
         bv.reshape(num_heads, 1, d)], axis=2)            # (nh, 1, 3d)
    w_out_heads = wo.reshape(num_heads, d, H)             # (nh, d, H)
    b_out = bo.reshape(1, H)

    kernel = functools.partial(_attention_kernel,
                               num_heads=num_heads, head_dim=d)

    flops = (2 * B * S * H * 3 * H                # Q/K/V projections
             + 4 * B * num_heads * S * S * d      # scores + PV
             + 2 * B * S * H * H)                 # output projection
    transcendentals = B * num_heads * (S * S + S)  # exp + reciprocal
    itemsize = x.dtype.itemsize
    bytes_accessed = (2 * B * S * H + 4 * H * H + 4 * H) * itemsize

    # Scoped-VMEM limit from the resident set: double-buffered x/out blocks,
    # double-buffered per-head weight blocks, f32 accumulator, and ONE head's
    # score/exp temporaries (+50% headroom), clamped to sane bounds.
    vmem_est = (4 * S * H * itemsize                          # x + out (x2 bufs)
                + 4 * H * 3 * d * itemsize + 4 * d * H * itemsize  # weights (x2)
                + S * H * 4                                   # f32 accumulator
                + 2 * S * S * 4                               # scores + exp
                + 4 * S * 3 * d * 4)                          # qkv/q/k/v temps
    vmem_limit = min(110 * 1024 * 1024,
                     max(32 * 1024 * 1024, int(vmem_est * 1.5)))

    out = pl.pallas_call(
        kernel,
        out_shape=jax.ShapeDtypeStruct((B, S, H), x.dtype),
        grid_spec=pltpu.PrefetchScalarGridSpec(
            num_scalar_prefetch=0,
            grid=(B, num_heads),                  # head (reduction) axis last
            in_specs=[
                pl.BlockSpec((1, S, H), lambda b, h: (b, 0, 0)),      # x
                pl.BlockSpec((1, H, 3 * d), lambda b, h: (h, 0, 0)),  # W_qkv[h]
                pl.BlockSpec((1, 1, 3 * d), lambda b, h: (h, 0, 0)),  # b_qkv[h]
                pl.BlockSpec((1, d, H), lambda b, h: (h, 0, 0)),      # W_out[h]
                pl.BlockSpec((1, H), lambda b, h: (0, 0)),            # b_out
            ],
            out_specs=pl.BlockSpec((1, S, H), lambda b, h: (b, 0, 0)),
            scratch_shapes=[pltpu.VMEM((S, H), jnp.float32)],         # out acc
        ),
        compiler_params=pltpu.CompilerParams(
            dimension_semantics=("parallel", "arbitrary"),
            vmem_limit_bytes=vmem_limit),
        cost_estimate=pl.CostEstimate(
            flops=flops,
            transcendentals=transcendentals,
            bytes_accessed=bytes_accessed),
    )(x, w_qkv_heads, b_qkv_heads, w_out_heads, b_out)

    return out


def reference_attention(x, wq, bq, wk, bk, wv, bv, wo, bo, num_heads):
    B, S, H = x.shape
    d = H // num_heads

    def lin(t, w, b):
        return jnp.einsum("bsh,hi->bsi", t, w) + b

    def split_heads(t):
        return t.reshape(B, S, num_heads, d).transpose(0, 2, 1, 3)

    q = split_heads(lin(x, wq, bq))
    k = split_heads(lin(x, wk, bk))
    v = split_heads(lin(x, wv, bv))
    scores = jnp.einsum("bhqd,bhkd->bhqk", q, k) / jnp.sqrt(jnp.float32(d))
    probs = jax.nn.softmax(scores, axis=-1)
    ctx = jnp.einsum("bhqk,bhkd->bhqd", probs, v)
    ctx = ctx.transpose(0, 2, 1, 3).reshape(B, S, H)
    return jnp.einsum("bsh,hi->bsi", ctx, wo) + bo


if __name__ == "__main__":
    batch, seq, hidden, num_heads = 2, 8, 32, 4

    key = jax.random.PRNGKey(0)
    keys = jax.random.split(key, 9)

    x = jax.random.normal(keys[0], (batch, seq, hidden), dtype=jnp.float32)

    # nn.Linear stores weight as [out, in]; we keep the transposed [in, out].
    def mk_w(k):
        return jax.random.normal(k, (hidden, hidden), dtype=jnp.float32) * 0.02

    def mk_b(k):
        return jax.random.normal(k, (hidden,), dtype=jnp.float32) * 0.02

    wq, bq = mk_w(keys[1]), mk_b(keys[2])
    wk, bk = mk_w(keys[3]), mk_b(keys[4])
    wv, bv = mk_w(keys[5]), mk_b(keys[6])
    wo, bo = mk_w(keys[7]), mk_b(keys[8])

    y = gpt2_attention(x, wq, bq, wk, bk, wv, bv, wo, bo, num_heads=num_heads)
    jax.block_until_ready(y)

    y_ref = reference_attention(x, wq, bq, wk, bk, wv, bv, wo, bo, num_heads)
    assert y.shape == (batch, seq, hidden)
    # Tolerance accounts for the approximate (EUP) reciprocal in the deferred
    # softmax normalization; error is well below this at these scales.
    assert jnp.allclose(y, y_ref, atol=1e-3, rtol=1e-3), "mismatch vs JAX reference"

    print("KERNEL_OK")
</pallas_src>

<mosaic_0001>
module attributes {stable_mosaic.version = 11 : i64} {
  func.func @_attention_kernel(%arg0: i32, %arg1: i32, %arg2: memref<1x8x32xf32, #tpu.memory_space<vmem>>, %arg3: memref<1x32x24xf32, #tpu.memory_space<vmem>>, %arg4: memref<1x1x24xf32, #tpu.memory_space<vmem>>, %arg5: memref<1x8x32xf32, #tpu.memory_space<vmem>>, %arg6: memref<1x32xf32, #tpu.memory_space<vmem>>, %arg7: memref<1x8x32xf32, #tpu.memory_space<vmem>>, %arg8: memref<8x32xf32, #tpu.memory_space<vmem>>) attributes {dimension_semantics = [#tpu.dimension_semantics<parallel>, #tpu.dimension_semantics<arbitrary>], iteration_bounds = array<i64: 2, 4>, scalar_prefetch = 0 : i64, scratch_operands = 1 : i64, tpu.core_type = #tpu.core_type<tc>, window_params = [{transform_indices = @transform_0, window_bounds = array<i64: 1, 8, 32>}, {transform_indices = @transform_1, window_bounds = array<i64: 1, 32, 24>}, {transform_indices = @transform_2, window_bounds = array<i64: 1, 1, 24>}, {transform_indices = @transform_3, window_bounds = array<i64: 1, 8, 32>}, {pipeline_mode = #tpu.pipeline_mode<synchronous>, transform_indices = @transform_4, window_bounds = array<i64: 1, 32>}, {transform_indices = @transform_5, window_bounds = array<i64: 1, 8, 32>}]} {
    %c0_i32 = arith.constant 0 : i32
    %0 = arith.cmpi eq, %arg1, %c0_i32 : i32
    %1 = arith.extui %0 : i1 to i32
    %c0_i32_0 = arith.constant 0 : i32
    %2 = arith.cmpi ne, %1, %c0_i32_0 : i32
    scf.if %2 {
      %cst_23 = arith.constant 0.000000e+00 : f32
      %38 = vector.broadcast %cst_23 : f32 to vector<8x32xf32>
      %c0_24 = arith.constant 0 : index
      %c0_25 = arith.constant 0 : index
      %39 = vector.load %arg8[%c0_24, %c0_25] : memref<8x32xf32, #tpu.memory_space<vmem>>, vector<8x32xf32>
      tpu.vector_store %arg8[%c0_24, %c0_25], %38 {strides = array<i32>} : memref<8x32xf32, #tpu.memory_space<vmem>>, vector<8x32xf32>,
    } else {
    }
    %c0 = arith.constant 0 : index
    %c0_1 = arith.constant 0 : index
    %c0_2 = arith.constant 0 : index
    %3 = vector.load %arg2[%c0, %c0_1, %c0_2] : memref<1x8x32xf32, #tpu.memory_space<vmem>>, vector<1x8x32xf32>
    %4 = vector.shape_cast %3 : vector<1x8x32xf32> to vector<8x32xf32>
    %c0_3 = arith.constant 0 : index
    %c0_4 = arith.constant 0 : index
    %c0_5 = arith.constant 0 : index
    %5 = vector.load %arg3[%c0_3, %c0_4, %c0_5] : memref<1x32x24xf32, #tpu.memory_space<vmem>>, vector<1x32x24xf32>
    %6 = vector.shape_cast %5 : vector<1x32x24xf32> to vector<32x24xf32>
    %cst = arith.constant dense<0.000000e+00> : vector<8x24xf32>
    %7 = tpu.matmul %4, %6, %cst {dimension_numbers = #tpu.dot_dimension_numbers<[1], [0], [0], [1], [0, 0, 1, 1], [], []>} : vector<8x32xf32>, vector<32x24xf32>, vector<8x24xf32> -> vector<8x24xf32>
    %c0_6 = arith.constant 0 : index
    %c0_7 = arith.constant 0 : index
    %c0_8 = arith.constant 0 : index
    %8 = vector.load %arg4[%c0_6, %c0_7, %c0_8] : memref<1x1x24xf32, #tpu.memory_space<vmem>>, vector<1x1x24xf32>
    %9 = vector.shape_cast %8 : vector<1x1x24xf32> to vector<1x24xf32>
    %10 = vector.broadcast %9 : vector<1x24xf32> to vector<8x24xf32>
    %11 = arith.addf %7, %10 : vector<8x24xf32>
    %12 = vector.extract_strided_slice %11 {offsets = [0, 0], sizes = [8, 8], strides = [1, 1]} : vector<8x24xf32> to vector<8x8xf32>
    %cst_9 = arith.constant 0.353553385 : f32
    %13 = vector.broadcast %cst_9 : f32 to vector<8x8xf32>
    %14 = arith.mulf %12, %13 : vector<8x8xf32>
    %15 = vector.extract_strided_slice %11 {offsets = [0, 8], sizes = [8, 8], strides = [1, 1]} : vector<8x24xf32> to vector<8x8xf32>
    %16 = vector.extract_strided_slice %11 {offsets = [0, 16], sizes = [8, 8], strides = [1, 1]} : vector<8x24xf32> to vector<8x8xf32>
    %cst_10 = arith.constant dense<0.000000e+00> : vector<8x8xf32>
    %17 = tpu.matmul %14, %15, %cst_10 {dimension_numbers = #tpu.dot_dimension_numbers<[1], [1], [0], [0], [0, 0, 1, 0], [], []>} : vector<8x8xf32>, vector<8x8xf32>, vector<8x8xf32> -> vector<8x8xf32>
    %cst_11 = arith.constant dense<0xFF800000> : vector<8xf32>
    %18 = vector.multi_reduction <maximumf>, %17, %cst_11 [1] : vector<8x8xf32> to vector<8xf32>
    %19 = vector.shape_cast %18 : vector<8xf32> to vector<8x1xf32>
    %20 = vector.broadcast %19 : vector<8x1xf32> to vector<8x8xf32>
    %21 = arith.subf %17, %20 : vector<8x8xf32>
    %22 = math.exp %21 : vector<8x8xf32>
    %cst_12 = arith.constant dense<0.000000e+00> : vector<8xf32>
    %23 = vector.multi_reduction <add>, %22, %cst_12 [1] : vector<8x8xf32> to vector<8xf32>
    %24 = vector.shape_cast %23 : vector<8xf32> to vector<8x1xf32>
    %cst_13 = arith.constant dense<0.000000e+00> : vector<8x8xf32>
    %25 = tpu.matmul %22, %16, %cst_13 {dimension_numbers = #tpu.dot_dimension_numbers<[1], [0], [0], [1], [0, 0, 1, 1], [], []>} : vector<8x8xf32>, vector<8x8xf32>, vector<8x8xf32> -> vector<8x8xf32>
    %26 = tpu.reciprocal %24 {approx = true} : vector<8x1xf32> -> vector<8x1xf32>
    %27 = vector.broadcast %26 : vector<8x1xf32> to vector<8x8xf32>
    %28 = arith.mulf %25, %27 : vector<8x8xf32>
    %c0_14 = arith.constant 0 : index
    %c0_15 = arith.constant 0 : index
    %29 = vector.load %arg8[%c0_14, %c0_15] : memref<8x32xf32, #tpu.memory_space<vmem>>, vector<8x32xf32>
    %c0_16 = arith.constant 0 : index
    %c0_17 = arith.constant 0 : index
    %c0_18 = arith.constant 0 : index
    %30 = vector.load %arg5[%c0_16, %c0_17, %c0_18] : memref<1x8x32xf32, #tpu.memory_space<vmem>>, vector<1x8x32xf32>
    %31 = vector.shape_cast %30 : vector<1x8x32xf32> to vector<8x32xf32>
    %cst_19 = arith.constant dense<0.000000e+00> : vector<8x32xf32>
    %32 = tpu.matmul %28, %31, %cst_19 {dimension_numbers = #tpu.dot_dimension_numbers<[1], [0], [0], [1], [0, 0, 1, 1], [], []>} : vector<8x8xf32>, vector<8x32xf32>, vector<8x32xf32> -> vector<8x32xf32>
    %33 = arith.addf %29, %32 : vector<8x32xf32>
    %c0_20 = arith.constant 0 : index
    %c0_21 = arith.constant 0 : index
    %34 = vector.load %arg8[%c0_20, %c0_21] : memref<8x32xf32, #tpu.memory_space<vmem>>, vector<8x32xf32>
    tpu.vector_store %arg8[%c0_20, %c0_21], %33 {strides = array<i32>} : memref<8x32xf32, #tpu.memory_space<vmem>>, vector<8x32xf32>,
    %c3_i32 = arith.constant 3 : i32
    %35 = arith.cmpi eq, %arg1, %c3_i32 : i32
    %36 = arith.extui %35 : i1 to i32
    %c0_i32_22 = arith.constant 0 : i32
    %37 = arith.cmpi ne, %36, %c0_i32_22 : i32
    scf.if %37 {
      %c0_23 = arith.constant 0 : index
      %c0_24 = arith.constant 0 : index
      %38 = vector.load %arg8[%c0_23, %c0_24] : memref<8x32xf32, #tpu.memory_space<vmem>>, vector<8x32xf32>
      %c0_25 = arith.constant 0 : index
      %c0_26 = arith.constant 0 : index
      %39 = vector.load %arg6[%c0_25, %c0_26] : memref<1x32xf32, #tpu.memory_space<vmem>>, vector<1x32xf32>
      %40 = vector.broadcast %39 : vector<1x32xf32> to vector<8x32xf32>
      %41 = arith.addf %38, %40 : vector<8x32xf32>
      %c0_27 = arith.constant 0 : index
      %c0_28 = arith.constant 0 : index
      %c0_29 = arith.constant 0 : index
      %42 = vector.load %arg7[%c0_27, %c0_28, %c0_29] : memref<1x8x32xf32, #tpu.memory_space<vmem>>, vector<1x8x32xf32>
      %43 = vector.shape_cast %42 : vector<1x8x32xf32> to vector<8x32xf32>
      %44 = vector.shape_cast %41 : vector<8x32xf32> to vector<1x8x32xf32>
      tpu.vector_store %arg7[%c0_27, %c0_28, %c0_29], %44 {strides = array<i32>} : memref<1x8x32xf32, #tpu.memory_space<vmem>>, vector<1x8x32xf32>,
    } else {
    }
    return
  }
  func.func @transform_0(%arg0: i32, %arg1: i32) -> (i32, i32, i32) {
    %c0_i32 = arith.constant 0 : i32
    %c0_i32_0 = arith.constant 0 : i32
    %c0_i32_1 = arith.constant 0 : i32
    return %arg0, %c0_i32, %c0_i32_0 : i32, i32, i32
  }
  func.func @transform_1(%arg0: i32, %arg1: i32) -> (i32, i32, i32) {
    %c0_i32 = arith.constant 0 : i32
    %c0_i32_0 = arith.constant 0 : i32
    %c0_i32_1 = arith.constant 0 : i32
    return %arg1, %c0_i32, %c0_i32_0 : i32, i32, i32
  }
  func.func @transform_2(%arg0: i32, %arg1: i32) -> (i32, i32, i32) {
    %c0_i32 = arith.constant 0 : i32
    %c0_i32_0 = arith.constant 0 : i32
    %c0_i32_1 = arith.constant 0 : i32
    return %arg1, %c0_i32, %c0_i32_0 : i32, i32, i32
  }
  func.func @transform_3(%arg0: i32, %arg1: i32) -> (i32, i32, i32) {
    %c0_i32 = arith.constant 0 : i32
    %c0_i32_0 = arith.constant 0 : i32
    %c0_i32_1 = arith.constant 0 : i32
    return %arg1, %c0_i32, %c0_i32_0 : i32, i32, i32
  }
  func.func @transform_4(%arg0: i32, %arg1: i32) -> (i32, i32) {
    %c0_i32 = arith.constant 0 : i32
    %c0_i32_0 = arith.constant 0 : i32
    %c0_i32_1 = arith.constant 0 : i32
    return %c0_i32, %c0_i32_0 : i32, i32
  }
  func.func @transform_5(%arg0: i32, %arg1: i32) -> (i32, i32, i32) {
    %c0_i32 = arith.constant 0 : i32
    %c0_i32_0 = arith.constant 0 : i32
    %c0_i32_1 = arith.constant 0 : i32
    return %arg0, %c0_i32, %c0_i32_0 : i32, i32, i32
  }
}

</mosaic_0001>

<llo_original>
// kernel: gpt2_attention.1
$region0: #{gpt2_attention.1}
  #allocation0 [shape = 'u32[]', space=smem, size = 0x4, offset = 0x4, fixed_abs, tag = 'smem constant byte address 0x4 - core index']
  #allocation1 [shape = 'u32[72,128]{1,0:T(1,128)}', space=vmem, size = 0x9000, scoped, tag = 'internal scratch']
  #allocation2 [shape = 'f32[8,32]{1,0:T(8,128)}', space=vmem, size = 0x1000, scoped, tag = 'scratch operand']
  %s0 = inlined_call_operand.vmem [shape: f32[2,8,32], index: 0, kind: input, shape index: {}]
  %s1 = inlined_call_operand.vmem [shape: f32[4,32,24], index: 1, kind: input, shape index: {}]
  %s2 = inlined_call_operand.vmem [shape: f32[4,1,24], index: 2, kind: input, shape index: {}]
  %s3 = inlined_call_operand.vmem [shape: f32[4,8,32], index: 3, kind: input, shape index: {}]
  %s4 = inlined_call_operand.vmem [shape: f32[1,32], index: 4, kind: input, shape index: {}]
  %s5 = inlined_call_operand.hbm [shape: f32[2,8,32], index: 5, kind: output, shape index: {}]
  %s6 = sld [smem:[#allocation0]]
  $region61: #{gpt2_attention.1} parent=0
    _
  %s8 = ssub.s32 1, %s6
  %s9 = scalar_select 0, %s8, %s6
  $region1: #{gpt2_attention.1} parent=0
    #allocation3 [shape = 'u8[8192]{0}', space=vmem, size = 0x2000, scoped, tag = 'output window, operand 0']
    #allocation4 [shape = 's32[2]{0}', space=sflag, size = 0x8, scoped, tag = 'scoped memory for gpt2_attention.1']
    %10 = vsyncpa [#allocation4], 0
    %s11 = scalar_lea.sflag [#allocation4], 1
    %12 = vsyncpa %s11, 0
    loop: start=0, step=1, limit=10
    $region2: #{gpt2_attention.1} parent=1 // loop_pre_header
      _
    $region3: #{gpt2_attention.1} parent=1 // loop_header
      %s14 = sphi 0, %s18
      %p15 = scmp.ge.s32.totalorder %s14, 10
      %s21 = sphi 0, %s33
      %s22 = sphi 0, %s29
      %s23 = sphi 0, %s21
      %s24 = sphi 0, %s22
      %s25 = sphi 0, %s23
      %s26 = sphi 0, %s24
      %s36 = sphi 0, %s38
      %s39 = sphi 0, %s36
      %s40 = sphi 0, %s39
      %s56 = sphi 0, %s40
      %s62 = sphi 0, %s64
      %s65 = sphi 0, %s62
      %s66 = sphi 0, %s65
      %s82 = sphi 0, %s66
      %s88 = sphi 0, %s90
      %s91 = sphi 0, %s88
      %s92 = sphi 0, %s91
      %s108 = sphi 0, %s92
      %s114 = sphi 0, %s116
      %s117 = sphi 0, %s114
      %s118 = sphi 0, %s117
      %s134 = sphi 0, %s118
      %s138 = sphi 0, %s138
      %s140 = sphi 0, %s138
      %s141 = sphi 0, %s140
      %s155 = sphi 0, %s141
      %s161 = sphi 0, %s163
      %s164 = sphi 0, %s161
      %s165 = sphi 0, %s164
      %s181 = sphi 0, %s165
    $region4: #{gpt2_attention.1} parent=1 // loop_header_branch
      %17 = sbr.rel (%p15) target = $region8
    $region5: #{gpt2_attention.1} parent=1 // loop_body
      %s19 = ssub.s32 %s14, 1
      %s20 = ssub.s32 %s14, 2
      %s27 = sadd.s32 1, %s22
      %p28 = scmp.ge.s32.totalorder %s27, 4
      %s29 = scalar_select %p28, 0, %s27
      %s30 = sadd.s32 1, %s21
      %s31 = scalar_select %p28, %s30, %s21
      %p32 = scmp.ge.s32.totalorder %s31, 2
      %s33 = scalar_select %p32, 0, %s31
      %s34 = ssub.s32 %s21, %s33
      %p35 = scmp.eq.s32.totalorder %s34, 0
      %s37 = sadd.s32 %s36, 1
      %s38 = scalar_select %p35, %s36, %s37
      %p41 = pneg %p35
      %p42 = scmp.eq.s32.totalorder %s14, 7
      %p43 = por %p41, %p42
      %p44 = scmp.ne.s32.totalorder %s36, %s39
      %p45 = scmp.eq.s32.totalorder %s14, 0
      %p46 = por %p44, %p45
      %p47 = scmp.ne.s32.totalorder %s36, %s39
      %p48 = scmp.eq.s32.totalorder %s19, 7
      %p49 = por %p47, %p48
      %p50 = scmp.ne.s32.totalorder %s39, %s40
      %p51 = scmp.eq.s32.totalorder %s19, 0
      %p52 = por %p50, %p51
      %p53 = scmp.ne.s32.totalorder %s39, %s40
      %p54 = scmp.eq.s32.totalorder %s20, 7
      %p55 = por %p53, %p54
      %p57 = scmp.ne.s32.totalorder %s40, %s56
      %p58 = scmp.eq.s32.totalorder %s20, 0
      %p59 = por %p57, %p58
      %s60 = ssub.s32 %s22, %s29
      %p61 = scmp.eq.s32.totalorder %s60, 0
      %s63 = sadd.s32 %s62, 1
      %s64 = scalar_select %p61, %s62, %s63
      %p67 = pneg %p61
      %p68 = scmp.eq.s32.totalorder %s14, 7
      %p69 = por %p67, %p68
      %p70 = scmp.ne.s32.totalorder %s62, %s65
      %p71 = scmp.eq.s32.totalorder %s14, 0
      %p72 = por %p70, %p71
      %p73 = scmp.ne.s32.totalorder %s62, %s65
      %p74 = scmp.eq.s32.totalorder %s19, 7
      %p75 = por %p73, %p74
      %p76 = scmp.ne.s32.totalorder %s65, %s66
      %p77 = scmp.eq.s32.totalorder %s19, 0
      %p78 = por %p76, %p77
      %p79 = scmp.ne.s32.totalorder %s65, %s66
      %p80 = scmp.eq.s32.totalorder %s20, 7
      %p81 = por %p79, %p80
      %p83 = scmp.ne.s32.totalorder %s66, %s82
      %p84 = scmp.eq.s32.totalorder %s20, 0
      %p85 = por %p83, %p84
      %s86 = ssub.s32 %s22, %s29
      %p87 = scmp.eq.s32.totalorder %s86, 0
      %s89 = sadd.s32 %s88, 1
      %s90 = scalar_select %p87, %s88, %s89
      %p93 = pneg %p87
      %p94 = scmp.eq.s32.totalorder %s14, 7
      %p95 = por %p93, %p94
      %p96 = scmp.ne.s32.totalorder %s88, %s91
      %p97 = scmp.eq.s32.totalorder %s14, 0
      %p98 = por %p96, %p97
      %p99 = scmp.ne.s32.totalorder %s88, %s91
      %p100 = scmp.eq.s32.totalorder %s19, 7
      %p101 = por %p99, %p100
      %p102 = scmp.ne.s32.totalorder %s91, %s92
      %p103 = scmp.eq.s32.totalorder %s19, 0
      %p104 = por %p102, %p103
      %p105 = scmp.ne.s32.totalorder %s91, %s92
      %p106 = scmp.eq.s32.totalorder %s20, 7
      %p107 = por %p105, %p106
      %p109 = scmp.ne.s32.totalorder %s92, %s108
      %p110 = scmp.eq.s32.totalorder %s20, 0
      %p111 = por %p109, %p110
      %s112 = ssub.s32 %s22, %s29
      %p113 = scmp.eq.s32.totalorder %s112, 0
      %s115 = sadd.s32 %s114, 1
      %s116 = scalar_select %p113, %s114, %s115
      %p119 = pneg %p113
      %p120 = scmp.eq.s32.totalorder %s14, 7
      %p121 = por %p119, %p120
      %p122 = scmp.ne.s32.totalorder %s114, %s117
      %p123 = scmp.eq.s32.totalorder %s14, 0
      %p124 = por %p122, %p123
      %p125 = scmp.ne.s32.totalorder %s114, %s117
      %p126 = scmp.eq.s32.totalorder %s19, 7
      %p127 = por %p125, %p126
      %p128 = scmp.ne.s32.totalorder %s117, %s118
      %p129 = scmp.eq.s32.totalorder %s19, 0
      %p130 = por %p128, %p129
      %p131 = scmp.ne.s32.totalorder %s117, %s118
      %p132 = scmp.eq.s32.totalorder %s20, 7
      %p133 = por %p131, %p132
      %p135 = scmp.ne.s32.totalorder %s118, %s134
      %p136 = scmp.eq.s32.totalorder %s20, 0
      %p137 = por %p135, %p136
      %s139 = sadd.s32 %s138, 1
      %p142 = scmp.eq.s32.totalorder %s14, 7
      %p143 = scmp.ne.s32.totalorder %s138, %s140
      %p144 = scmp.eq.s32.totalorder %s14, 0
      %p145 = por %p143, %p144
      %p146 = scmp.ne.s32.totalorder %s138, %s140
      %p147 = scmp.eq.s32.totalorder %s19, 7
      %p148 = por %p146, %p147
      %p149 = scmp.ne.s32.totalorder %s140, %s141
      %p150 = scmp.eq.s32.totalorder %s19, 0
      %p151 = por %p149, %p150
      %p152 = scmp.ne.s32.totalorder %s140, %s141
      %p153 = scmp.eq.s32.totalorder %s20, 7
      %p154 = por %p152, %p153
      %p156 = scmp.ne.s32.totalorder %s141, %s155
      %p157 = scmp.eq.s32.totalorder %s20, 0
      %p158 = por %p156, %p157
      %s159 = ssub.s32 %s21, %s33
      %p160 = scmp.eq.s32.totalorder %s159, 0
      %s162 = sadd.s32 %s161, 1
      %s163 = scalar_select %p160, %s161, %s162
      %p166 = pneg %p160
      %p167 = scmp.eq.s32.totalorder %s14, 7
      %p168 = por %p166, %p167
      %p169 = scmp.ne.s32.totalorder %s161, %s164
      %p170 = scmp.eq.s32.totalorder %s14, 0
      %p171 = por %p169, %p170
      %p172 = scmp.ne.s32.totalorder %s161, %s164
      %p173 = scmp.eq.s32.totalorder %s19, 7
      %p174 = por %p172, %p173
      %p175 = scmp.ne.s32.totalorder %s164, %s165
      %p176 = scmp.eq.s32.totalorder %s19, 0
      %p177 = por %p175, %p176
      %p178 = scmp.ne.s32.totalorder %s164, %s165
      %p179 = scmp.eq.s32.totalorder %s20, 7
      %p180 = por %p178, %p179
      %p182 = scmp.ne.s32.totalorder %s165, %s181
      %p183 = scmp.eq.s32.totalorder %s20, 0
      %p184 = por %p182, %p183
      %p185 = scmp.le.s32.totalorder 1, %s14
      %p186 = scmp.lt.s32.totalorder %s14, 9
      %p187 = pnand %p185, %p186
      %p188 = pneg %p187
      // Predicated region
      $region9: #{gpt2_attention.1} parent=5 // pred_check
        _
      $region10: #{gpt2_attention.1} parent=5 // pred_check_branch
        %190 = sbr.rel (%p187) target = $region12
      $region11: #{gpt2_attention.1} parent=5 // pred_region
        %s191 = ssub.s32 %s14, 1
        // Predicated region
        $region13: #{gpt2_attention.1} parent=11 // pred_check
          %p192 = pneg %p151
        $region14: #{gpt2_attention.1} parent=11 // pred_check_branch
          %194 = sbr.rel (%p192) target = $region16
        $region15: #{gpt2_attention.1} parent=11 // pred_region
          _
        $region16: #{gpt2_attention.1} parent=11 // pred_fallthru
          _
      $region12: #{gpt2_attention.1} parent=5 // pred_fallthru
        _
      %p195 = scmp.lt.s32.totalorder %s14, 8
      // Predicated region
      $region17: #{gpt2_attention.1} parent=5 // pred_check
        %p196 = pneg %p195
      $region18: #{gpt2_attention.1} parent=5 // pred_check_branch
        %198 = sbr.rel (%p196) target = $region20
      $region19: #{gpt2_attention.1} parent=5 // pred_region
        // Predicated region
        $region21: #{gpt2_attention.1} parent=19 // pred_check
          %p199 = pneg %p46
        $region22: #{gpt2_attention.1} parent=19 // pred_check_branch
          %201 = sbr.rel (%p199) target = $region24
        $region23: #{gpt2_attention.1} parent=19 // pred_region
          %p202 = scmp.lt.s32.totalorder %s21, 1
          %s203 = scalar_select %p202, %s21, 1
          %s204 = smul.addr %s203, 8
          %s205 = scalar_lea.vmem %s0, %s204
        $region24: #{gpt2_attention.1} parent=19 // pred_fallthru
          _
        // Predicated region
        $region25: #{gpt2_attention.1} parent=19 // pred_check
          %p206 = pneg %p72
        $region26: #{gpt2_attention.1} parent=19 // pred_check_branch
          %208 = sbr.rel (%p206) target = $region28
        $region27: #{gpt2_attention.1} parent=19 // pred_region
          %p209 = scmp.lt.s32.totalorder %s22, 3
          %s210 = scalar_select %p209, %s22, 3
          %s211 = smul.addr %s210, 4
          %s212 = smul.addr %s211, 8
          %s213 = scalar_lea.vmem %s1, %s212
        $region28: #{gpt2_attention.1} parent=19 // pred_fallthru
          _
        // Predicated region
        $region29: #{gpt2_attention.1} parent=19 // pred_check
          %p214 = pneg %p98
        $region30: #{gpt2_attention.1} parent=19 // pred_check_branch
          %216 = sbr.rel (%p214) target = $region32
        $region31: #{gpt2_attention.1} parent=19 // pred_region
          %p217 = scmp.lt.s32.totalorder %s22, 3
          %s218 = scalar_select %p217, %s22, 3
          %s219 = scalar_lea.vmem %s2, %s218
        $region32: #{gpt2_attention.1} parent=19 // pred_fallthru
          _
        // Predicated region
        $region33: #{gpt2_attention.1} parent=19 // pred_check
          %p220 = pneg %p124
        $region34: #{gpt2_attention.1} parent=19 // pred_check_branch
          %222 = sbr.rel (%p220) target = $region36
        $region35: #{gpt2_attention.1} parent=19 // pred_region
          %p223 = scmp.lt.s32.totalorder %s22, 3
          %s224 = scalar_select %p223, %s22, 3
          %s225 = smul.addr %s224, 8
          %s226 = scalar_lea.vmem %s3, %s225
        $region36: #{gpt2_attention.1} parent=19 // pred_fallthru
          _
      $region20: #{gpt2_attention.1} parent=5 // pred_fallthru
        _
      %p227 = scmp.le.s32.totalorder 1, %s14
      %p228 = scmp.lt.s32.totalorder %s14, 9
      %p229 = pnand %p227, %p228
      %p230 = pneg %p229
      // Predicated region
      $region37: #{gpt2_attention.1} parent=5 // pred_check
        _
      $region38: #{gpt2_attention.1} parent=5 // pred_check_branch
        %232 = sbr.rel (%p229) target = $region40
      $region39: #{gpt2_attention.1} parent=5 // pred_region
        %s233 = ssub.s32 %s14, 1
        %p234 = scmp.lt.s32.totalorder %s23, 1
        %s235 = scalar_select %p234, %s23, 1
        %s236 = smul.addr %s235, 8
        %s237 = scalar_lea.vmem %s0, %s236
        %p238 = pneg %p52
        %p239 = pneg %p49
        %p240 = scmp.lt.s32.totalorder %s24, 3
        %s241 = scalar_select %p240, %s24, 3
        %s242 = smul.addr %s241, 4
        %s243 = smul.addr %s242, 8
        %s244 = scalar_lea.vmem %s1, %s243
        %p245 = pneg %p78
        %p246 = pneg %p75
        %p247 = scmp.lt.s32.totalorder %s24, 3
        %s248 = scalar_select %p247, %s24, 3
        %s249 = scalar_lea.vmem %s2, %s248
        %p250 = pneg %p104
        %p251 = pneg %p101
        %p252 = scmp.lt.s32.totalorder %s24, 3
        %s253 = scalar_select %p252, %s24, 3
        %s254 = smul.addr %s253, 8
        %s255 = scalar_lea.vmem %s3, %s254
        %p256 = pneg %p130
        %p257 = pneg %p127
        %p258 = pneg %p151
        %p259 = pneg %p148
        %p260 = pneg %p177
        %p261 = pneg %p174
        %s262 = sand.u32 %s164, 1
        %s263 = scalar_lea.sflag [#allocation4], %s262
        %s264 = sand.u32 %s164, 1
        %s265 = smul.addr %s264, 8
        %s266 = scalar_lea.vmem [#allocation3], %s265
        %p267 = scmp.lt.s32.totalorder %s23, 1
        %s268 = scalar_select %p267, %s23, 1
        %s269 = smul.addr %s268, 8
        %s270 = scalar_lea.vmem %s0, %s269
        %p271 = scmp.lt.s32.totalorder %s24, 3
        %s272 = scalar_select %p271, %s24, 3
        %s273 = smul.addr %s272, 4
        %s274 = smul.addr %s273, 8
        %s275 = scalar_lea.vmem %s1, %s274
        %p276 = scmp.lt.s32.totalorder %s24, 3
        %s277 = scalar_select %p276, %s24, 3
        %s278 = scalar_lea.vmem %s2, %s277
        %p279 = scmp.lt.s32.totalorder %s24, 3
        %s280 = scalar_select %p279, %s24, 3
        %s281 = smul.addr %s280, 8
        %s282 = scalar_lea.vmem %s3, %s281
        %p283 = scmp.eq.s32.totalorder %s24, 0
        // Predicated region
        $region41: #{gpt2_attention.1} parent=39 // pred_check
          %p284 = pneg %p283
        $region42: #{gpt2_attention.1} parent=39 // pred_check_branch
          %286 = sbr.rel (%p284) target = $region44
        $region43: #{gpt2_attention.1} parent=39 // pred_region
          %vm287 = vcmask 261120
          %288 = vst.msk [vmem:[#allocation2] sm:$0xff] %vm287, 0.0
        $region44: #{gpt2_attention.1} parent=39 // pred_fallthru
          _
        %v289 = vld [vmem:[%s270] sm:$0xff]
        %v290 = vld [vmem:[%s275] sm:$0xff]
        %v291 = vld [vmem:[%s275 + $0x8] sm:$0xff]
        %v292 = vld [vmem:[%s275 + $0x10] sm:$0xff]
        %v293 = vld [vmem:[%s275 + $0x18] sm:$0xff]
        %v294 = vld [vmem:[%s278] sm:$0x1]
        %v296 = vperm.slane %v294, 0
        %vm298 = vcmask 261120
        %v300 = vsel %vm298, %v289, 0
        %302 = vmatpush.msra.mxu0 0.0
        %303 = vmatpush.msra.mxu0 0.0
        %304 = vmatpush.msra.mxu0 0.0
        %305 = vmatpush.msra.mxu0 0.0
        %306 = vmatpush.msra.mxu0 0.0
        %307 = vmatpush.msra.mxu0 0.0
        %308 = vmatpush.msra.mxu0 0.0
        %309 = vmatpush.msra.mxu0 0.0
        %310 = vmatpush.msra.mxu0 0.0
        %311 = vmatpush.msra.mxu0 0.0
        %312 = vmatpush.msra.mxu0 0.0
        %313 = vmatpush.msra.mxu0 0.0
        %314 = vmatpush.msra.mxu0 %v293
        %315 = vmatpush.msra.mxu0 %v292
        %316 = vmatpush.msra.mxu0 %v291
        %317 = vmatpush.msra.mxu0 %v290
        %318 = vmatmul.f32.gmra.mxu0 %v300
        %v319 = vpop.f32.mrf.mxu0
        %v320 = vadd.f32 %v296, %v319
        %321 = vdwg.mxu0
        %v322 = vmul.f32 %v320, 0.35355338
        %324 = vrot.lane.b32.xlu0 %v320, 120
        %v325 = vpop.permute.xlu0 %324
        %vm326 = vcmask 64512
        %v328 = vsel %vm326, %v322, 0
        %v330 = vsel %vm326, %v325, 0
        %332 = vmatpush.xpose.msra.mxu0 0.0
        %333 = vmatpush.xpose.msra.mxu0 0.0
        %334 = vmatpush.xpose.msra.mxu0 0.0
        %335 = vmatpush.xpose.msra.mxu0 0.0
        %336 = vmatpush.xpose.msra.mxu0 0.0
        %337 = vmatpush.xpose.msra.mxu0 0.0
        %338 = vmatpush.xpose.msra.mxu0 0.0
        %339 = vmatpush.xpose.msra.mxu0 0.0
        %340 = vmatpush.xpose.msra.mxu0 0.0
        %341 = vmatpush.xpose.msra.mxu0 0.0
        %342 = vmatpush.xpose.msra.mxu0 0.0
        %343 = vmatpush.xpose.msra.mxu0 0.0
        %344 = vmatpush.xpose.msra.mxu0 0.0
        %345 = vmatpush.xpose.msra.mxu0 0.0
        %346 = vmatpush.xpose.msra.mxu0 0.0
        %347 = vmatpush.xpose.msra.mxu0 %v330
        %348 = vmatmul.f32.gmra.mxu0 %v328
        %v349 = vpop.f32.mrf.mxu0
        %v350 = vadd.f32 0.0, %v349
        %351 = vdwg.mxu0
        %v352 = vsel %vm326, %v350, -inf
        %353 = vmax.xlane.f32.xlu0 %v352
        %v354 = vpop.xlane.xlu0 %353
        %v355 = vsub.f32 %v350, %v354
        %v356 = vmul.f32 %v355, 1.442695
        %v357 = vpow.pop %v356
        %v358 = vsel %vm326, %v357, 0.0
        %359 = vadd.xlane.f32.xlu0 %v358
        %v360 = vpop.xlane.xlu0 %359
        %361 = vrot.lane.b32.xlu0 %v320, 112
        %v362 = vpop.permute.xlu0 %361
        %v365 = vsel %vm326, %v357, 0
        %367 = vmatpush.msra.mxu0 0.0
        %368 = vmatpush.msra.mxu0 0.0
        %369 = vmatpush.msra.mxu0 0.0
        %370 = vmatpush.msra.mxu0 0.0
        %371 = vmatpush.msra.mxu0 0.0
        %372 = vmatpush.msra.mxu0 0.0
        %373 = vmatpush.msra.mxu0 0.0
        %374 = vmatpush.msra.mxu0 0.0
        %375 = vmatpush.msra.mxu0 0.0
        %376 = vmatpush.msra.mxu0 0.0
        %377 = vmatpush.msra.mxu0 0.0
        %378 = vmatpush.msra.mxu0 0.0
        %379 = vmatpush.msra.mxu0 0.0
        %380 = vmatpush.msra.mxu0 0.0
        %381 = vmatpush.msra.mxu0 0.0
        %382 = vmatpush.msra.mxu0 %v362
        %383 = vmatmul.f32.gmra.mxu0 %v365
        %v384 = vpop.f32.mrf.mxu0
        %v385 = vadd.f32 0.0, %v384
        %386 = vdwg.mxu0
        %v387 = vrcp.pop %v360
        %v388 = vmul.f32 %v385, %v387
        %v389 = vld [vmem:[#allocation2] sm:$0xff]
        %v390 = vld [vmem:[%s282] sm:$0xff]
        %v392 = vsel %vm326, %v388, 0
        %394 = vmatpush.msra.mxu0 0.0
        %395 = vmatpush.msra.mxu0 0.0
        %396 = vmatpush.msra.mxu0 0.0
        %397 = vmatpush.msra.mxu0 0.0
        %398 = vmatpush.msra.mxu0 0.0
        %399 = vmatpush.msra.mxu0 0.0
        %400 = vmatpush.msra.mxu0 0.0
        %401 = vmatpush.msra.mxu0 0.0
        %402 = vmatpush.msra.mxu0 0.0
        %403 = vmatpush.msra.mxu0 0.0
        %404 = vmatpush.msra.mxu0 0.0
        %405 = vmatpush.msra.mxu0 0.0
        %406 = vmatpush.msra.mxu0 0.0
        %407 = vmatpush.msra.mxu0 0.0
        %408 = vmatpush.msra.mxu0 0.0
        %409 = vmatpush.msra.mxu0 %v390
        %410 = vmatmul.f32.gmra.mxu0 %v392
        %v411 = vpop.f32.mrf.mxu0
        %v412 = vadd.f32 0.0, %v411
        %413 = vdwg.mxu0
        %v414 = vadd.f32 %v389, %v412
        %415 = vst.msk [vmem:[#allocation2] sm:$0xff] %vm298, %v414
        %p416 = scmp.eq.s32.totalorder %s24, 3
        // Predicated region
        $region45: #{gpt2_attention.1} parent=39 // pred_check
          %p417 = pneg %p416
        $region46: #{gpt2_attention.1} parent=39 // pred_check_branch
          %419 = sbr.rel (%p417) target = $region48
        $region47: #{gpt2_attention.1} parent=39 // pred_region
          %v420 = vld [vmem:[#allocation2] sm:$0xff]
          %v421 = vld [vmem:[%s4] sm:$0x1]
          %v423 = vperm.slane %v421, 0
          %v425 = vadd.f32 %v420, %v423
          %426 = vst.msk [vmem:[%s266] sm:$0xff] %vm298, %v425
        $region48: #{gpt2_attention.1} parent=39 // pred_fallthru
          _
        %s427 = sand.u32 %s164, 1
        %s428 = scalar_lea.sflag [#allocation4], %s427
        %s429 = sand.u32 %s164, 1
        %s430 = smul.addr %s429, 8
        %s431 = scalar_lea.vmem [#allocation3], %s430
        // Predicated region
        $region49: #{gpt2_attention.1} parent=39 // pred_check
          %p432 = pneg %p174
        $region50: #{gpt2_attention.1} parent=39 // pred_check_branch
          %434 = sbr.rel (%p432) target = $region52
        $region51: #{gpt2_attention.1} parent=39 // pred_region
          %436 = vsyncadd %s428, 0
          %s437 = smul.addr %s23, 8
          %s438 = scalar_lea.hbm %s5, %s437
          %s440 = sshll.u32 %s431, 4
          %s441 = int_to_ptr.vmem [resolvable:$true] %s440
          %s442 = sshll.u32 %s438, 4
          %s443 = int_to_ptr.hbm [resolvable:$true] %s442
          %445 = dma.vmem_to_hbm [thread:$0]  %s441, 128, %s443, %s428
        $region52: #{gpt2_attention.1} parent=39 // pred_fallthru
          _
      $region40: #{gpt2_attention.1} parent=5 // pred_fallthru
        _
      %p446 = scmp.le.s32.totalorder 2, %s14
      // Predicated region
      $region53: #{gpt2_attention.1} parent=5 // pred_check
        %p447 = pneg %p446
      $region54: #{gpt2_attention.1} parent=5 // pred_check_branch
        %449 = sbr.rel (%p447) target = $region56
      $region55: #{gpt2_attention.1} parent=5 // pred_region
        %s450 = ssub.s32 %s14, 2
        // Predicated region
        $region57: #{gpt2_attention.1} parent=55 // pred_check
          %p451 = pneg %p180
        $region58: #{gpt2_attention.1} parent=55 // pred_check_branch
          %453 = sbr.rel (%p451) target = $region60
        $region59: #{gpt2_attention.1} parent=55 // pred_region
          %s454 = sand.u32 %s165, 1
          %s455 = scalar_lea.sflag [#allocation4], %s454
          %s456 = sand.u32 %s165, 1
          %s457 = smul.addr %s456, 8
          %s458 = scalar_lea.vmem [#allocation3], %s457
          %460 = dma.done %s455, 128
        $region60: #{gpt2_attention.1} parent=55 // pred_fallthru
          _
      $region56: #{gpt2_attention.1} parent=5 // pred_fallthru
        _
    $region6: #{gpt2_attention.1} parent=1 // loop_footer
      %s18 = sadd.s32 1, %s14
    $region7: #{gpt2_attention.1} parent=1 // loop_footer_branch
      %13 = sbr.rel target = $region3
    $region8: #{gpt2_attention.1} parent=1 // loop_exit
      _
    %461 = vsyncpa [#allocation4], 1
    %s462 = scalar_lea.sflag [#allocation4], 1
    %463 = vsyncpa %s462, 1

</llo_original>
